<compile_context>
chip_gen: v7x
topology: tpu7x:2x2x1
jax: 0.10.0
libtpu: 0.0.40
codegen_flags: <defaults>
</compile_context>

<pallas_src>
import jax
import jax.numpy as jnp
from jax.experimental import pallas as pl
from jax.experimental.pallas import tpu as pltpu


def _control_unit_kernel(q_ref, ctx_ref, w_in_ref, b_in_ref,
                         w_u_ref, b_u_ref, w_a_ref, b_a_ref, out_ref):
    # Per grid step:
    #   q_ref:    (TB, D)      batch tile of question vectors
    #   ctx_ref:  (TB, L, D)   batch tile of context words
    #   w_in/w_u: (D, D)   b_in/b_u: (1, D)
    #   w_a_ref:  (1, D)       attn Linear(D, 1) weight as a lane-dense row
    #   b_a_ref:  (1,)         attn bias scalar in SMEM
    #   out_ref:  (TB, D)
    mm_dtype = w_in_ref.dtype            # f32 or bf16 matmul inputs

    q = q_ref[...].astype(mm_dtype)

    # control_input: Linear(D, D) + Tanh  -> (TB, D) @ (D, D) on the MXU
    h = jnp.tanh(
        jnp.dot(q, w_in_ref[...], preferred_element_type=jnp.float32)
        + b_in_ref[...].astype(jnp.float32))

    # control_input_u[step]: Linear(D, D)
    h = (jnp.dot(h.astype(mm_dtype), w_u_ref[...],
                 preferred_element_type=jnp.float32)
         + b_u_ref[...].astype(jnp.float32))                      # (TB, D) f32

    ctx = ctx_ref[...].astype(jnp.float32)                        # (TB, L, D)

    # attn logits: fold the Linear(D, 1) weight into h, then VPU multiply +
    # lane reduce.  sum_d(h_d * w_d * ctx_{l,d}) + b == (h*ctx) @ W_attn + b.
    hw = h * w_a_ref[...].astype(jnp.float32)                     # (TB, D)
    logits = jnp.sum(hw[:, None, :] * ctx, axis=-1) + b_a_ref[0]  # (TB, L)

    # softmax over the question-length axis (lane axis -> lane-dense tiles).
    m = jnp.max(logits, axis=-1, keepdims=True)
    e = jnp.exp(logits - m)
    attn = e * pl.reciprocal(jnp.sum(e, axis=-1, keepdims=True),
                             approx=True)                          # (TB, L)

    # next_control = sum_L(attn * context)  -> lane/sublane-dense (TB, D) store
    out_ref[...] = jnp.sum(attn[:, :, None] * ctx, axis=1).astype(out_ref.dtype)


def _round_up(x, m):
    return (x + m - 1) // m * m


def control_unit_forward(question, context, question_lengths, step, params,
                         *, batch_tile=128, matmul_dtype=jnp.float32):
    """Pallas ControlUnit forward.

    question:         [B, D] float32
    context:          [B, L, D] float32
    question_lengths: [B] int32 (unused by the reference forward())
    step:             python int selecting which control_input_u Linear to use
    batch_tile:       rows per grid step (128 default; 256 is fine on v6e/v7x
                      if the TB*L*D context tile stays within the VMEM budget)
    matmul_dtype:     jnp.float32 or jnp.bfloat16 for the two D x D matmuls
                      (f32 accumulation either way)
    """
    del question_lengths  # not used in the reference forward()
    B, D = question.shape
    _, L, _ = context.shape

    # ---- glue done once in plain JAX -------------------------------------
    w_in = params["w_in"].astype(matmul_dtype)                    # (D, D)
    w_u = params["w_u_all"][step].astype(matmul_dtype)            # (D, D)
    b_in = params["b_in"].astype(jnp.float32)                     # (1, D)
    b_u = params["b_u_all"][step].astype(jnp.float32)             # (1, D)
    w_attn_row = params["w_attn"].reshape(1, D).astype(jnp.float32)
    b_attn = params["b_attn"].reshape(1).astype(jnp.float32)      # SMEM scalar

    # ---- batch tiling -----------------------------------------------------
    # Sublane-aligned batch tile; pad B with zero rows (padded rows produce a
    # uniform softmax over zero context -> zero output, sliced off below).
    tb = _round_up(min(batch_tile, _round_up(B, 8)), 8)
    b_pad = _round_up(B, tb)
    if b_pad != B:
        question = jnp.pad(question, ((0, b_pad - B), (0, 0)))
        context = jnp.pad(context, ((0, b_pad - B), (0, 0), (0, 0)))
    n_tiles = b_pad // tb

    out = pl.pallas_call(
        _control_unit_kernel,
        out_shape=jax.ShapeDtypeStruct((b_pad, D), jnp.float32),
        grid_spec=pltpu.PrefetchScalarGridSpec(
            num_scalar_prefetch=0,
            grid=(n_tiles,),
            in_specs=[
                pl.BlockSpec((tb, D), lambda b: (b, 0)),          # question
                pl.BlockSpec((tb, L, D), lambda b: (b, 0, 0)),    # context
                pl.BlockSpec((D, D), lambda b: (0, 0)),           # W_in
                pl.BlockSpec((1, D), lambda b: (0, 0)),           # b_in
                pl.BlockSpec((D, D), lambda b: (0, 0)),           # W_u[step]
                pl.BlockSpec((1, D), lambda b: (0, 0)),           # b_u[step]
                pl.BlockSpec((1, D), lambda b: (0, 0)),           # W_attn row
                pl.BlockSpec(memory_space=pltpu.MemorySpace.SMEM),  # b_attn
            ],
            out_specs=pl.BlockSpec((tb, D), lambda b: (b, 0)),
        ),
        compiler_params=pltpu.CompilerParams(
            dimension_semantics=("parallel",)),
    )(question, context, w_in, b_in, w_u, b_u, w_attn_row, b_attn)
    return out[:B]


def _reference_forward(question, context, step, params):
    """Pure-JAX reference mirroring the PyTorch forward exactly (f32)."""
    h = jnp.tanh(question @ params["w_in"] + params["b_in"])
    h = h @ params["w_u_all"][step] + params["b_u_all"][step]
    interactions = h[:, None, :] * context
    logits = interactions @ params["w_attn"] + params["b_attn"]   # (B, L, 1)
    attn = jax.nn.softmax(logits, axis=1)
    return jnp.sum(attn * context, axis=1)


def make_params(key, module_dim, max_step):
    ks = jax.random.split(key, 6)
    scale = 1.0 / jnp.sqrt(module_dim)
    return {
        "w_in": jax.random.normal(ks[0], (module_dim, module_dim),
                                  jnp.float32) * scale,
        "b_in": jax.random.normal(ks[1], (1, module_dim), jnp.float32) * scale,
        "w_u_all": jax.random.normal(ks[2], (max_step, module_dim, module_dim),
                                     jnp.float32) * scale,
        "b_u_all": jax.random.normal(ks[3], (max_step, 1, module_dim),
                                     jnp.float32) * scale,
        "w_attn": jax.random.normal(ks[4], (module_dim, 1), jnp.float32) * scale,
        "b_attn": jax.random.normal(ks[5], (1, 1), jnp.float32) * scale,
    }


if __name__ == "__main__":
    B, L, D = 4, 8, 128           # batch, question length, module_dim
    MAX_STEP = 4
    STEP = 2

    key = jax.random.PRNGKey(0)
    k_q, k_c, k_p = jax.random.split(key, 3)

    question = jax.random.normal(k_q, (B, D), jnp.float32)
    context = jax.random.normal(k_c, (B, L, D), jnp.float32)
    question_lengths = jnp.full((B,), L, dtype=jnp.int32)  # unused by forward
    params = make_params(k_p, D, MAX_STEP)

    # f32 matmul path
    out = control_unit_forward(question, context, question_lengths, STEP, params)
    out = jax.block_until_ready(out)

    ref = _reference_forward(question, context, STEP, params)
    assert out.shape == (B, D)
    # approx reciprocal in the softmax denominator -> slightly looser tol
    assert jnp.allclose(out, ref, atol=5e-3, rtol=5e-3), (
        f"max abs diff {jnp.max(jnp.abs(out - ref))}")

    # bf16 matmul path (v6e/v7x MXU-friendly), f32 accumulation; sanity check.
    out_bf16 = control_unit_forward(question, context, question_lengths, STEP,
                                    params, matmul_dtype=jnp.bfloat16)
    out_bf16 = jax.block_until_ready(out_bf16)
    assert out_bf16.shape == (B, D)
    assert bool(jnp.all(jnp.isfinite(out_bf16)))

    print("KERNEL_OK")
</pallas_src>

<mosaic_0001>
module attributes {stable_mosaic.version = 11 : i64} {
  func.func @_control_unit_kernel(%arg0: i32, %arg1: memref<8x128xf32, #tpu.memory_space<vmem>>, %arg2: memref<8x8x128xf32, #tpu.memory_space<vmem>>, %arg3: memref<128x128xf32, #tpu.memory_space<vmem>>, %arg4: memref<1x128xf32, #tpu.memory_space<vmem>>, %arg5: memref<128x128xf32, #tpu.memory_space<vmem>>, %arg6: memref<1x128xf32, #tpu.memory_space<vmem>>, %arg7: memref<1x128xf32, #tpu.memory_space<vmem>>, %arg8: memref<1xf32, #tpu.memory_space<smem>>, %arg9: memref<8x128xf32, #tpu.memory_space<vmem>>) attributes {dimension_semantics = [#tpu.dimension_semantics<parallel>], iteration_bounds = array<i64: 1>, scalar_prefetch = 0 : i64, scratch_operands = 0 : i64, tpu.core_type = #tpu.core_type<tc>, window_params = [{transform_indices = @transform_0, window_bounds = array<i64: 8, 128>}, {transform_indices = @transform_1, window_bounds = array<i64: 8, 8, 128>}, {pipeline_mode = #tpu.pipeline_mode<synchronous>, transform_indices = @transform_2, window_bounds = array<i64: 128, 128>}, {pipeline_mode = #tpu.pipeline_mode<synchronous>, transform_indices = @transform_3, window_bounds = array<i64: 1, 128>}, {pipeline_mode = #tpu.pipeline_mode<synchronous>, transform_indices = @transform_4, window_bounds = array<i64: 128, 128>}, {pipeline_mode = #tpu.pipeline_mode<synchronous>, transform_indices = @transform_5, window_bounds = array<i64: 1, 128>}, {pipeline_mode = #tpu.pipeline_mode<synchronous>, transform_indices = @transform_6, window_bounds = array<i64: 1, 128>}, {transform_indices = @transform_7, window_bounds = array<i64: 1>}, {transform_indices = @transform_8, window_bounds = array<i64: 8, 128>}]} {
    %c0 = arith.constant 0 : index
    %c0_0 = arith.constant 0 : index
    %0 = vector.load %arg1[%c0, %c0_0] : memref<8x128xf32, #tpu.memory_space<vmem>>, vector<8x128xf32>
    %c0_1 = arith.constant 0 : index
    %c0_2 = arith.constant 0 : index
    %1 = vector.load %arg3[%c0_1, %c0_2] : memref<128x128xf32, #tpu.memory_space<vmem>>, vector<128x128xf32>
    %cst = arith.constant dense<0.000000e+00> : vector<8x128xf32>
    %2 = tpu.matmul %0, %1, %cst {dimension_numbers = #tpu.dot_dimension_numbers<[1], [0], [0], [1], [0, 0, 1, 1], [], []>} : vector<8x128xf32>, vector<128x128xf32>, vector<8x128xf32> -> vector<8x128xf32>
    %c0_3 = arith.constant 0 : index
    %c0_4 = arith.constant 0 : index
    %3 = vector.load %arg4[%c0_3, %c0_4] : memref<1x128xf32, #tpu.memory_space<vmem>>, vector<1x128xf32>
    %4 = vector.broadcast %3 : vector<1x128xf32> to vector<8x128xf32>
    %5 = arith.addf %2, %4 : vector<8x128xf32>
    %6 = math.tanh %5 : vector<8x128xf32>
    %c0_5 = arith.constant 0 : index
    %c0_6 = arith.constant 0 : index
    %7 = vector.load %arg5[%c0_5, %c0_6] : memref<128x128xf32, #tpu.memory_space<vmem>>, vector<128x128xf32>
    %cst_7 = arith.constant dense<0.000000e+00> : vector<8x128xf32>
    %8 = tpu.matmul %6, %7, %cst_7 {dimension_numbers = #tpu.dot_dimension_numbers<[1], [0], [0], [1], [0, 0, 1, 1], [], []>} : vector<8x128xf32>, vector<128x128xf32>, vector<8x128xf32> -> vector<8x128xf32>
    %c0_8 = arith.constant 0 : index
    %c0_9 = arith.constant 0 : index
    %9 = vector.load %arg6[%c0_8, %c0_9] : memref<1x128xf32, #tpu.memory_space<vmem>>, vector<1x128xf32>
    %10 = vector.broadcast %9 : vector<1x128xf32> to vector<8x128xf32>
    %11 = arith.addf %8, %10 : vector<8x128xf32>
    %c0_10 = arith.constant 0 : index
    %c0_11 = arith.constant 0 : index
    %c0_12 = arith.constant 0 : index
    %12 = vector.load %arg2[%c0_10, %c0_11, %c0_12] : memref<8x8x128xf32, #tpu.memory_space<vmem>>, vector<8x8x128xf32>
    %c0_13 = arith.constant 0 : index
    %c0_14 = arith.constant 0 : index
    %13 = vector.load %arg7[%c0_13, %c0_14] : memref<1x128xf32, #tpu.memory_space<vmem>>, vector<1x128xf32>
    %14 = vector.broadcast %13 : vector<1x128xf32> to vector<8x128xf32>
    %15 = arith.mulf %11, %14 : vector<8x128xf32>
    %16 = vector.shape_cast %15 : vector<8x128xf32> to vector<8x1x128xf32>
    %17 = vector.broadcast %16 : vector<8x1x128xf32> to vector<8x8x128xf32>
    %18 = arith.mulf %17, %12 : vector<8x8x128xf32>
    %cst_15 = arith.constant dense<0.000000e+00> : vector<8x8xf32>
    %19 = vector.multi_reduction <add>, %18, %cst_15 [2] : vector<8x8x128xf32> to vector<8x8xf32>
    %c0_16 = arith.constant 0 : index
    %20 = memref.load %arg8[%c0_16] : memref<1xf32, #tpu.memory_space<smem>>
    %21 = vector.broadcast %20 : f32 to vector<8x8xf32>
    %22 = arith.addf %19, %21 : vector<8x8xf32>
    %cst_17 = arith.constant dense<0xFF800000> : vector<8xf32>
    %23 = vector.multi_reduction <maximumf>, %22, %cst_17 [1] : vector<8x8xf32> to vector<8xf32>
    %24 = vector.shape_cast %23 : vector<8xf32> to vector<8x1xf32>
    %25 = vector.broadcast %24 : vector<8x1xf32> to vector<8x8xf32>
    %26 = arith.subf %22, %25 : vector<8x8xf32>
    %27 = math.exp %26 : vector<8x8xf32>
    %cst_18 = arith.constant dense<0.000000e+00> : vector<8xf32>
    %28 = vector.multi_reduction <add>, %27, %cst_18 [1] : vector<8x8xf32> to vector<8xf32>
    %29 = vector.shape_cast %28 : vector<8xf32> to vector<8x1xf32>
    %30 = tpu.reciprocal %29 {approx = true} : vector<8x1xf32> -> vector<8x1xf32>
    %31 = vector.broadcast %30 : vector<8x1xf32> to vector<8x8xf32>
    %32 = arith.mulf %27, %31 : vector<8x8xf32>
    %33 = vector.shape_cast %32 : vector<8x8xf32> to vector<8x8x1xf32>
    %34 = vector.broadcast %33 : vector<8x8x1xf32> to vector<8x8x128xf32>
    %35 = arith.mulf %34, %12 : vector<8x8x128xf32>
    %cst_19 = arith.constant dense<0.000000e+00> : vector<8x128xf32>
    %36 = vector.multi_reduction <add>, %35, %cst_19 [1] : vector<8x8x128xf32> to vector<8x128xf32>
    %c0_20 = arith.constant 0 : index
    %c0_21 = arith.constant 0 : index
    %37 = vector.load %arg9[%c0_20, %c0_21] : memref<8x128xf32, #tpu.memory_space<vmem>>, vector<8x128xf32>
    tpu.vector_store %arg9[%c0_20, %c0_21], %36 {strides = array<i32>} : memref<8x128xf32, #tpu.memory_space<vmem>>, vector<8x128xf32>,
    return
  }
  func.func @transform_0(%arg0: i32) -> (i32, i32) {
    %c0_i32 = arith.constant 0 : i32
    %c0_i32_0 = arith.constant 0 : i32
    return %arg0, %c0_i32 : i32, i32
  }
  func.func @transform_1(%arg0: i32) -> (i32, i32, i32) {
    %c0_i32 = arith.constant 0 : i32
    %c0_i32_0 = arith.constant 0 : i32
    %c0_i32_1 = arith.constant 0 : i32
    return %arg0, %c0_i32, %c0_i32_0 : i32, i32, i32
  }
  func.func @transform_2(%arg0: i32) -> (i32, i32) {
    %c0_i32 = arith.constant 0 : i32
    %c0_i32_0 = arith.constant 0 : i32
    %c0_i32_1 = arith.constant 0 : i32
    return %c0_i32, %c0_i32_0 : i32, i32
  }
  func.func @transform_3(%arg0: i32) -> (i32, i32) {
    %c0_i32 = arith.constant 0 : i32
    %c0_i32_0 = arith.constant 0 : i32
    %c0_i32_1 = arith.constant 0 : i32
    return %c0_i32, %c0_i32_0 : i32, i32
  }
  func.func @transform_4(%arg0: i32) -> (i32, i32) {
    %c0_i32 = arith.constant 0 : i32
    %c0_i32_0 = arith.constant 0 : i32
    %c0_i32_1 = arith.constant 0 : i32
    return %c0_i32, %c0_i32_0 : i32, i32
  }
  func.func @transform_5(%arg0: i32) -> (i32, i32) {
    %c0_i32 = arith.constant 0 : i32
    %c0_i32_0 = arith.constant 0 : i32
    %c0_i32_1 = arith.constant 0 : i32
    return %c0_i32, %c0_i32_0 : i32, i32
  }
  func.func @transform_6(%arg0: i32) -> (i32, i32) {
    %c0_i32 = arith.constant 0 : i32
    %c0_i32_0 = arith.constant 0 : i32
    %c0_i32_1 = arith.constant 0 : i32
    return %c0_i32, %c0_i32_0 : i32, i32
  }
  func.func @transform_7(%arg0: i32) -> i32 {
    %c0_i32 = arith.constant 0 : i32
    %c0_i32_0 = arith.constant 0 : i32
    return %c0_i32 : i32
  }
  func.func @transform_8(%arg0: i32) -> (i32, i32) {
    %c0_i32 = arith.constant 0 : i32
    %c0_i32_0 = arith.constant 0 : i32
    return %arg0, %c0_i32 : i32, i32
  }
}

</mosaic_0001>

<llo_original>
// kernel: tpu_custom_call.1
$region0: #{tpu_custom_call.1}
  #allocation0 [shape = 'u32[]', space=smem, size = 0x4, offset = 0x4, fixed_abs, tag = 'smem constant byte address 0x4 - core index']
  #allocation1 [shape = 'u32[144,128]{1,0:T(1,128)}', space=vmem, size = 0x12000, scoped, tag = 'internal scratch']
  #allocation2 [shape = 'f32[1]{0:T(128)S(6)}', space=smem, size = 0x200, scoped, tag = 'scoped memory for tpu_custom_call.1']
  %s0 = inlined_call_operand.hbm [shape: f32[8,128], index: 0, kind: input, shape index: {}]
  %s1 = inlined_call_operand.hbm [shape: f32[8,8,128], index: 1, kind: input, shape index: {}]
  %s2 = inlined_call_operand.hbm [shape: f32[128,128], index: 2, kind: input, shape index: {}]
  %s3 = inlined_call_operand.vmem [shape: f32[1,128], index: 3, kind: input, shape index: {}]
  %s4 = inlined_call_operand.hbm [shape: f32[128,128], index: 4, kind: input, shape index: {}]
  %s5 = inlined_call_operand.vmem [shape: f32[1,128], index: 5, kind: input, shape index: {}]
  %s6 = inlined_call_operand.vmem [shape: f32[1,128], index: 6, kind: input, shape index: {}]
  %s7 = inlined_call_operand.<no memory space> [shape: f32[1], index: 7, kind: input, shape index: {}]
  %s8 = inlined_call_operand.hbm [shape: f32[8,128], index: 8, kind: output, shape index: {}]
  %s9 = sld [smem:[#allocation0]]
  $region58: #{tpu_custom_call.1} parent=0
    _
  %s11 = ssub.s32 1, %s9
  %s12 = scalar_select 0, %s11, %s9
  %13 = sst [smem:[#allocation2]] %s7
  $region1: #{tpu_custom_call.1} parent=0
    #allocation3 [shape = 'u8[4096]{0}', space=vmem, size = 0x1000, scoped, tag = 'input window, operand 0, single buffered']
    #allocation4 [shape = 's32[1]{0}', space=sflag, size = 0x4, scoped, tag = 'scoped memory for tpu_custom_call.1']
    #allocation5 [shape = 's32[1]{0}', space=sflag, size = 0x4, scoped, tag = 'scoped memory for tpu_custom_call.1']
    #allocation6 [shape = 'u8[32768]{0}', space=vmem, size = 0x8000, scoped, tag = 'input window, operand 1, single buffered']
    #allocation7 [shape = 's32[1]{0}', space=sflag, size = 0x4, scoped, tag = 'scoped memory for tpu_custom_call.1']
    #allocation8 [shape = 'u8[65536]{0}', space=vmem, size = 0x10000, scoped, tag = 'input window, operand 2, single buffered']
    #allocation9 [shape = 'u8[65536]{0}', space=vmem, size = 0x10000, scoped, tag = 'input window, operand 4, single buffered']
    #allocation10 [shape = 's32[1]{0}', space=sflag, size = 0x4, scoped, tag = 'scoped memory for tpu_custom_call.1']
    #allocation11 [shape = 'u8[4096]{0}', space=vmem, size = 0x1000, scoped, tag = 'output window, operand 0, single buffered']
    %14 = vsyncpa [#allocation4], 0
    %15 = vsyncpa [#allocation7], 0
    %16 = vsyncpa [#allocation10], 0
    %17 = vsyncpa [#allocation5], 0
    // Predicated region
    $region2: #{tpu_custom_call.1} parent=1 // pred_check
      _
    $region3: #{tpu_custom_call.1} parent=1 // pred_check_branch
      %19 = sbr.rel (0) target = $region5
    $region4: #{tpu_custom_call.1} parent=1 // pred_region
      %s21 = ssub.s32 128, 128
      %22 = vsyncadd [#allocation4], %s21
      %s24 = sshll.u32 [#allocation3], 4
      %s25 = int_to_ptr.vmem [resolvable:$true] %s24
      %27 = dma.hbm_to_vmem [thread:$0]  %s0, 128, %s25, [#allocation4]
    $region5: #{tpu_custom_call.1} parent=1 // pred_fallthru
      _
    // Predicated region
    $region6: #{tpu_custom_call.1} parent=1 // pred_check
      _
    $region7: #{tpu_custom_call.1} parent=1 // pred_check_branch
      %29 = sbr.rel (0) target = $region9
    $region8: #{tpu_custom_call.1} parent=1 // pred_region
      %s31 = ssub.s32 1024, 1024
      %32 = vsyncadd [#allocation7], %s31
      %s33 = sshll.u32 [#allocation6], 4
      %s34 = int_to_ptr.vmem [resolvable:$true] %s33
      %39 = dma.hbm_to_vmem [thread:$0]  %s1, 1024, %s34, [#allocation7], 128, 128, 8
    $region9: #{tpu_custom_call.1} parent=1 // pred_fallthru
      _
    // Predicated region
    $region10: #{tpu_custom_call.1} parent=1 // pred_check
      _
    $region11: #{tpu_custom_call.1} parent=1 // pred_check_branch
      %41 = sbr.rel (0) target = $region13
    $region12: #{tpu_custom_call.1} parent=1 // pred_region
      %s43 = ssub.s32 2048, 2048
      %44 = vsyncadd [#allocation7], %s43
      %s45 = sshll.u32 [#allocation8], 4
      %s46 = int_to_ptr.vmem [resolvable:$true] %s45
      %51 = dma.hbm_to_vmem [thread:$0]  %s2, 2048, %s46, [#allocation7], 128, 128, 8
    $region13: #{tpu_custom_call.1} parent=1 // pred_fallthru
      _
    // Predicated region
    $region14: #{tpu_custom_call.1} parent=1 // pred_check
      _
    $region15: #{tpu_custom_call.1} parent=1 // pred_check_branch
      %53 = sbr.rel (0) target = $region17
    $region16: #{tpu_custom_call.1} parent=1 // pred_region
      _
    $region17: #{tpu_custom_call.1} parent=1 // pred_fallthru
      _
    // Predicated region
    $region18: #{tpu_custom_call.1} parent=1 // pred_check
      _
    $region19: #{tpu_custom_call.1} parent=1 // pred_check_branch
      %55 = sbr.rel (0) target = $region21
    $region20: #{tpu_custom_call.1} parent=1 // pred_region
      %s57 = ssub.s32 2048, 2048
      %58 = vsyncadd [#allocation10], %s57
      %s59 = sshll.u32 [#allocation9], 4
      %s60 = int_to_ptr.vmem [resolvable:$true] %s59
      %65 = dma.hbm_to_vmem [thread:$0]  %s4, 2048, %s60, [#allocation10], 128, 128, 8
    $region21: #{tpu_custom_call.1} parent=1 // pred_fallthru
      _
    // Predicated region
    $region22: #{tpu_custom_call.1} parent=1 // pred_check
      _
    $region23: #{tpu_custom_call.1} parent=1 // pred_check_branch
      %67 = sbr.rel (0) target = $region25
    $region24: #{tpu_custom_call.1} parent=1 // pred_region
      _
    $region25: #{tpu_custom_call.1} parent=1 // pred_fallthru
      _
    // Predicated region
    $region26: #{tpu_custom_call.1} parent=1 // pred_check
      _
    $region27: #{tpu_custom_call.1} parent=1 // pred_check_branch
      %69 = sbr.rel (0) target = $region29
    $region28: #{tpu_custom_call.1} parent=1 // pred_region
      _
    $region29: #{tpu_custom_call.1} parent=1 // pred_fallthru
      _
    // Predicated region
    $region30: #{tpu_custom_call.1} parent=1 // pred_check
      _
    $region31: #{tpu_custom_call.1} parent=1 // pred_check_branch
      %71 = sbr.rel (0) target = $region33
    $region32: #{tpu_custom_call.1} parent=1 // pred_region
      _
    $region33: #{tpu_custom_call.1} parent=1 // pred_fallthru
      _
    // Predicated region
    $region34: #{tpu_custom_call.1} parent=1 // pred_check
      _
    $region35: #{tpu_custom_call.1} parent=1 // pred_check_branch
      %73 = sbr.rel (0) target = $region37
    $region36: #{tpu_custom_call.1} parent=1 // pred_region
      %74 = dma.done [#allocation4], 128
    $region37: #{tpu_custom_call.1} parent=1 // pred_fallthru
      _
    // Predicated region
    $region38: #{tpu_custom_call.1} parent=1 // pred_check
      _
    $region39: #{tpu_custom_call.1} parent=1 // pred_check_branch
      %76 = sbr.rel (0) target = $region41
    $region40: #{tpu_custom_call.1} parent=1 // pred_region
      %77 = dma.done [#allocation7], 1024
    $region41: #{tpu_custom_call.1} parent=1 // pred_fallthru
      _
    // Predicated region
    $region42: #{tpu_custom_call.1} parent=1 // pred_check
      _
    $region43: #{tpu_custom_call.1} parent=1 // pred_check_branch
      %79 = sbr.rel (0) target = $region45
    $region44: #{tpu_custom_call.1} parent=1 // pred_region
      %80 = dma.done [#allocation7], 2048
    $region45: #{tpu_custom_call.1} parent=1 // pred_fallthru
      _
    // Predicated region
    $region46: #{tpu_custom_call.1} parent=1 // pred_check
      _
    $region47: #{tpu_custom_call.1} parent=1 // pred_check_branch
      %82 = sbr.rel (0) target = $region49
    $region48: #{tpu_custom_call.1} parent=1 // pred_region
      %83 = dma.done [#allocation10], 2048
    $region49: #{tpu_custom_call.1} parent=1 // pred_fallthru
      _
    %v84 = vld [vmem:[#allocation3] sm:$0xff]
    %v85 = vld [vmem:[#allocation8] sm:$0xff]
    %v86 = vld [vmem:[#allocation8 + $0x8] sm:$0xff]
    %v87 = vld [vmem:[#allocation8 + $0x10] sm:$0xff]
    %v88 = vld [vmem:[#allocation8 + $0x18] sm:$0xff]
    %v89 = vld [vmem:[#allocation8 + $0x20] sm:$0xff]
    %v90 = vld [vmem:[#allocation8 + $0x28] sm:$0xff]
    %v91 = vld [vmem:[#allocation8 + $0x30] sm:$0xff]
    %v92 = vld [vmem:[#allocation8 + $0x38] sm:$0xff]
    %v93 = vld [vmem:[#allocation8 + $0x40] sm:$0xff]
    %v94 = vld [vmem:[#allocation8 + $0x48] sm:$0xff]
    %v95 = vld [vmem:[#allocation8 + $0x50] sm:$0xff]
    %v96 = vld [vmem:[#allocation8 + $0x58] sm:$0xff]
    %v97 = vld [vmem:[#allocation8 + $0x60] sm:$0xff]
    %v98 = vld [vmem:[#allocation8 + $0x68] sm:$0xff]
    %v99 = vld [vmem:[#allocation8 + $0x70] sm:$0xff]
    %v100 = vld [vmem:[#allocation8 + $0x78] sm:$0xff]
    %v101 = vld [vmem:[%s3] sm:$0x1]
    %v103 = vlaneseq
    %v104 = vshrl.u32 %v103, 7
    %v105 = vsub.s32 0, %v104
    %v106 = vrot.slane %v101, %v105
    %108 = vmatprep.subr.mxu0 0.0
    %109 = vmatpush1.msra.mxu0 %v85
    %110 = vmatprep.subr.mxu0 0.0
    %111 = vmatpush1.msra.mxu0 %v86
    %112 = vmatprep.subr.mxu0 0.0
    %113 = vmatpush1.msra.mxu0 %v87
    %114 = vmatprep.subr.mxu0 0.0
    %115 = vmatpush1.msra.mxu0 %v88
    %116 = vmatprep.subr.mxu0 0.0
    %117 = vmatpush1.msra.mxu0 %v89
    %118 = vmatprep.subr.mxu0 0.0
    %119 = vmatpush1.msra.mxu0 %v90
    %120 = vmatprep.subr.mxu0 0.0
    %121 = vmatpush1.msra.mxu0 %v91
    %122 = vmatprep.subr.mxu0 0.0
    %123 = vmatpush1.msra.mxu0 %v92
    %124 = vmatprep.subr.mxu0 0.0
    %125 = vmatpush1.msra.mxu0 %v93
    %126 = vmatprep.subr.mxu0 0.0
    %127 = vmatpush1.msra.mxu0 %v94
    %128 = vmatprep.subr.mxu0 0.0
    %129 = vmatpush1.msra.mxu0 %v95
    %130 = vmatprep.subr.mxu0 0.0
    %131 = vmatpush1.msra.mxu0 %v96
    %132 = vmatprep.subr.mxu0 0.0
    %133 = vmatpush1.msra.mxu0 %v97
    %134 = vmatprep.subr.mxu0 0.0
    %135 = vmatpush1.msra.mxu0 %v98
    %136 = vmatprep.subr.mxu0 0.0
    %137 = vmatpush1.msra.mxu0 %v99
    %138 = vmatprep.subr.mxu0 0.0
    %139 = vmatpush1.msra.mxu0 %v100
    %140 = vmatprep.subr.mxu0 0.0
    %141 = vmatpush1.msra.mxu0 0.0
    %142 = vmatprep.subr.mxu0 0.0
    %143 = vmatpush1.msra.mxu0 0.0
    %144 = vmatprep.subr.mxu0 0.0
    %145 = vmatpush1.msra.mxu0 0.0
    %146 = vmatprep.subr.mxu0 0.0
    %147 = vmatpush1.msra.mxu0 0.0
    %148 = vmatprep.subr.mxu0 0.0
    %149 = vmatpush1.msra.mxu0 0.0
    %150 = vmatprep.subr.mxu0 0.0
    %151 = vmatpush1.msra.mxu0 0.0
    %152 = vmatprep.subr.mxu0 0.0
    %153 = vmatpush1.msra.mxu0 0.0
    %154 = vmatprep.subr.mxu0 0.0
    %155 = vmatpush1.msra.mxu0 0.0
    %156 = vmatprep.subr.mxu0 0.0
    %157 = vmatpush1.msra.mxu0 0.0
    %158 = vmatprep.subr.mxu0 0.0
    %159 = vmatpush1.msra.mxu0 0.0
    %160 = vmatprep.subr.mxu0 0.0
    %161 = vmatpush1.msra.mxu0 0.0
    %162 = vmatprep.subr.mxu0 0.0
    %163 = vmatpush1.msra.mxu0 0.0
    %164 = vmatprep.subr.mxu0 0.0
    %165 = vmatpush1.msra.mxu0 0.0
    %166 = vmatprep.subr.mxu0 0.0
    %167 = vmatpush1.msra.mxu0 0.0
    %168 = vmatprep.subr.mxu0 0.0
    %169 = vmatpush1.msra.mxu0 0.0
    %170 = vmatprep.subr.mxu0 0.0
    %171 = vmatpush1.msra.mxu0 0.0
    %172 = vmatprep.mubr.f32.mxu0 0.0
    %173 = vmatmul.mubr.f32.gmra.mrb[0].mxu0 %v84
    %v174 = vpop.f32.mrb[0].mxu0
    %v175 = vadd.f32 %v106, %v174
    %v176 = vpop.f32.mrb[0].mxu0
    %177 = vdwg.mxu0
    %v178 = vtanh.pop %v175
    %v179 = vld [vmem:[#allocation9] sm:$0xff]
    %v180 = vld [vmem:[#allocation9 + $0x8] sm:$0xff]
    %v181 = vld [vmem:[#allocation9 + $0x10] sm:$0xff]
    %v182 = vld [vmem:[#allocation9 + $0x18] sm:$0xff]
    %v183 = vld [vmem:[#allocation9 + $0x20] sm:$0xff]
    %v184 = vld [vmem:[#allocation9 + $0x28] sm:$0xff]
    %v185 = vld [vmem:[#allocation9 + $0x30] sm:$0xff]
    %v186 = vld [vmem:[#allocation9 + $0x38] sm:$0xff]
    %v187 = vld [vmem:[#allocation9 + $0x40] sm:$0xff]
    %v188 = vld [vmem:[#allocation9 + $0x48] sm:$0xff]
    %v189 = vld [vmem:[#allocation9 + $0x50] sm:$0xff]
    %v190 = vld [vmem:[#allocation9 + $0x58] sm:$0xff]
    %v191 = vld [vmem:[#allocation9 + $0x60] sm:$0xff]
    %v192 = vld [vmem:[#allocation9 + $0x68] sm:$0xff]
    %v193 = vld [vmem:[#allocation9 + $0x70] sm:$0xff]
    %v194 = vld [vmem:[#allocation9 + $0x78] sm:$0xff]
    %v195 = vld [vmem:[%s5] sm:$0x1]
    %v197 = vlaneseq
    %v198 = vshrl.u32 %v197, 7
    %v199 = vsub.s32 0, %v198
    %v200 = vrot.slane %v195, %v199
    %202 = vmatprep.subr.mxu0 0.0
    %203 = vmatpush1.msra.mxu0 %v179
    %204 = vmatprep.subr.mxu0 0.0
    %205 = vmatpush1.msra.mxu0 %v180
    %206 = vmatprep.subr.mxu0 0.0
    %207 = vmatpush1.msra.mxu0 %v181
    %208 = vmatprep.subr.mxu0 0.0
    %209 = vmatpush1.msra.mxu0 %v182
    %210 = vmatprep.subr.mxu0 0.0
    %211 = vmatpush1.msra.mxu0 %v183
    %212 = vmatprep.subr.mxu0 0.0
    %213 = vmatpush1.msra.mxu0 %v184
    %214 = vmatprep.subr.mxu0 0.0
    %215 = vmatpush1.msra.mxu0 %v185
    %216 = vmatprep.subr.mxu0 0.0
    %217 = vmatpush1.msra.mxu0 %v186
    %218 = vmatprep.subr.mxu0 0.0
    %219 = vmatpush1.msra.mxu0 %v187
    %220 = vmatprep.subr.mxu0 0.0
    %221 = vmatpush1.msra.mxu0 %v188
    %222 = vmatprep.subr.mxu0 0.0
    %223 = vmatpush1.msra.mxu0 %v189
    %224 = vmatprep.subr.mxu0 0.0
    %225 = vmatpush1.msra.mxu0 %v190
    %226 = vmatprep.subr.mxu0 0.0
    %227 = vmatpush1.msra.mxu0 %v191
    %228 = vmatprep.subr.mxu0 0.0
    %229 = vmatpush1.msra.mxu0 %v192
    %230 = vmatprep.subr.mxu0 0.0
    %231 = vmatpush1.msra.mxu0 %v193
    %232 = vmatprep.subr.mxu0 0.0
    %233 = vmatpush1.msra.mxu0 %v194
    %234 = vmatprep.subr.mxu0 0.0
    %235 = vmatpush1.msra.mxu0 0.0
    %236 = vmatprep.subr.mxu0 0.0
    %237 = vmatpush1.msra.mxu0 0.0
    %238 = vmatprep.subr.mxu0 0.0
    %239 = vmatpush1.msra.mxu0 0.0
    %240 = vmatprep.subr.mxu0 0.0
    %241 = vmatpush1.msra.mxu0 0.0
    %242 = vmatprep.subr.mxu0 0.0
    %243 = vmatpush1.msra.mxu0 0.0
    %244 = vmatprep.subr.mxu0 0.0
    %245 = vmatpush1.msra.mxu0 0.0
    %246 = vmatprep.subr.mxu0 0.0
    %247 = vmatpush1.msra.mxu0 0.0
    %248 = vmatprep.subr.mxu0 0.0
    %249 = vmatpush1.msra.mxu0 0.0
    %250 = vmatprep.subr.mxu0 0.0
    %251 = vmatpush1.msra.mxu0 0.0
    %252 = vmatprep.subr.mxu0 0.0
    %253 = vmatpush1.msra.mxu0 0.0
    %254 = vmatprep.subr.mxu0 0.0
    %255 = vmatpush1.msra.mxu0 0.0
    %256 = vmatprep.subr.mxu0 0.0
    %257 = vmatpush1.msra.mxu0 0.0
    %258 = vmatprep.subr.mxu0 0.0
    %259 = vmatpush1.msra.mxu0 0.0
    %260 = vmatprep.subr.mxu0 0.0
    %261 = vmatpush1.msra.mxu0 0.0
    %262 = vmatprep.subr.mxu0 0.0
    %263 = vmatpush1.msra.mxu0 0.0
    %264 = vmatprep.subr.mxu0 0.0
    %265 = vmatpush1.msra.mxu0 0.0
    %266 = vmatprep.mubr.f32.mxu0 0.0
    %267 = vmatmul.mubr.f32.gmra.mrb[0].mxu0 %v178
    %v268 = vpop.f32.mrb[0].mxu0
    %v269 = vadd.f32 %v200, %v268
    %v270 = vpop.f32.mrb[0].mxu0
    %271 = vdwg.mxu0
    %v272 = vld [vmem:[#allocation6] sm:$0xff]
    %v273 = vld [vmem:[#allocation6 + $0x8] sm:$0xff]
    %v274 = vld [vmem:[#allocation6 + $0x10] sm:$0xff]
    %v275 = vld [vmem:[#allocation6 + $0x18] sm:$0xff]
    %v276 = vld [vmem:[#allocation6 + $0x20] sm:$0xff]
    %v277 = vld [vmem:[#allocation6 + $0x28] sm:$0xff]
    %v278 = vld [vmem:[#allocation6 + $0x30] sm:$0xff]
    %v279 = vld [vmem:[#allocation6 + $0x38] sm:$0xff]
    %v280 = vld [vmem:[%s6] sm:$0x1]
    %v282 = vlaneseq
    %v283 = vshrl.u32 %v282, 7
    %v284 = vsub.s32 0, %v283
    %v285 = vrot.slane %v280, %v284
    %v287 = vmul.f32 %v269, %v285
    %v289 = vcombine.high %v287, %v287
    %v291 = vunpack.c.l.s4 1966171168
    %v292 = vunpack.c.0.s8 %v291
    %v293 = vlaneseq
    %v294 = vshrl.u32 %v293, 7
    %v295 = vsub.s32 %v292, %v294
    %v296 = vrot.slane %v287, %v295
    %v298 = vunpack.c.l.s4 1966171168
    %v299 = vunpack.c.0.s8 %v298
    %v300 = vlaneseq
    %v301 = vshrl.u32 %v300, 7
    %v302 = vsub.s32 %v299, %v301
    %v303 = vrot.slane %v289, %v302
    %v304 = vcombine.high %v296, %v296
    %v305 = vcombine.high %v303, %v303
    %v307 = vunpack.c.l.s4 1966171168
    %v308 = vunpack.c.0.s8 %v307
    %v309 = vlaneseq
    %v310 = vshrl.u32 %v309, 7
    %v311 = vsub.s32 %v308, %v310
    %v312 = vrot.slane %v296, %v311
    %v314 = vunpack.c.l.s4 1966171168
    %v315 = vunpack.c.0.s8 %v314
    %v316 = vlaneseq
    %v317 = vshrl.u32 %v316, 7
    %v318 = vsub.s32 %v315, %v317
    %v319 = vrot.slane %v303, %v318
    %v321 = vunpack.c.l.s4 1966171168
    %v322 = vunpack.c.0.s8 %v321
    %v323 = vlaneseq
    %v324 = vshrl.u32 %v323, 7
    %v325 = vsub.s32 %v322, %v324
    %v326 = vrot.slane %v304, %v325
    %v328 = vunpack.c.l.s4 1966171168
    %v329 = vunpack.c.0.s8 %v328
    %v330 = vlaneseq
    %v331 = vshrl.u32 %v330, 7
    %v332 = vsub.s32 %v329, %v331
    %v333 = vrot.slane %v305, %v332
    %v334 = vcombine.high %v312, %v312
    %v335 = vcombine.high %v319, %v319
    %v336 = vcombine.high %v326, %v326
    %v337 = vcombine.high %v333, %v333
    %v338 = vlaneseq
    %v339 = vshrl.u32 %v338, 7
    %v340 = vsub.s32 0, %v339
    %v341 = vrot.slane %v312, %v340
    %v342 = vlaneseq
    %v343 = vshrl.u32 %v342, 7
    %v344 = vsub.s32 0, %v343
    %v345 = vrot.slane %v326, %v344
    %v346 = vlaneseq
    %v347 = vshrl.u32 %v346, 7
    %v348 = vsub.s32 0, %v347
    %v349 = vrot.slane %v334, %v348
    %v350 = vlaneseq
    %v351 = vshrl.u32 %v350, 7
    %v352 = vsub.s32 0, %v351
    %v353 = vrot.slane %v336, %v352
    %v354 = vlaneseq
    %v355 = vshrl.u32 %v354, 7
    %v356 = vsub.s32 0, %v355
    %v357 = vrot.slane %v319, %v356
    %v358 = vlaneseq
    %v359 = vshrl.u32 %v358, 7
    %v360 = vsub.s32 0, %v359
    %v361 = vrot.slane %v333, %v360
    %v362 = vlaneseq
    %v363 = vshrl.u32 %v362, 7
    %v364 = vsub.s32 0, %v363
    %v365 = vrot.slane %v335, %v364
    %v366 = vlaneseq
    %v367 = vshrl.u32 %v366, 7
    %v368 = vsub.s32 0, %v367
    %v369 = vrot.slane %v337, %v368
    %v378 = vmul.f32 %v341, %v272
    %v379 = vmul.f32 %v345, %v273
    %v380 = vmul.f32 %v349, %v274
    %v381 = vmul.f32 %v353, %v275
    %v382 = vmul.f32 %v357, %v276
    %v383 = vmul.f32 %v361, %v277
    %v384 = vmul.f32 %v365, %v278
    %v385 = vmul.f32 %v369, %v279
    %386 = vadd.xlane.f32.xlu0 %v378
    %v387 = vpop.xlane.xlu0 %386
    %388 = vadd.xlane.f32.xlu0 %v379
    %v389 = vpop.xlane.xlu0 %388
    %390 = vadd.xlane.f32.xlu0 %v380
    %v391 = vpop.xlane.xlu0 %390
    %392 = vadd.xlane.f32.xlu0 %v381
    %v393 = vpop.xlane.xlu0 %392
    %394 = vadd.xlane.f32.xlu0 %v382
    %v395 = vpop.xlane.xlu0 %394
    %396 = vadd.xlane.f32.xlu0 %v383
    %v397 = vpop.xlane.xlu0 %396
    %398 = vadd.xlane.f32.xlu0 %v384
    %v399 = vpop.xlane.xlu0 %398
    %400 = vadd.xlane.f32.xlu0 %v385
    %v401 = vpop.xlane.xlu0 %400
    %s402 = sld [smem:[#allocation2]]
    %v403 = vstv %s402
    %v404 = vadd.f32 %v387, %v403
    %v405 = vadd.f32 %v389, %v403
    %v406 = vadd.f32 %v391, %v403
    %v407 = vadd.f32 %v393, %v403
    %v408 = vadd.f32 %v395, %v403
    %v409 = vadd.f32 %v397, %v403
    %v410 = vadd.f32 %v399, %v403
    %v411 = vadd.f32 %v401, %v403
    %v420 = vlaneseq
    %v421 = vand.u32 %v420, 127
    %v422 = vlaneseq
    %v423 = vshrl.u32 %v422, 7
    %v424 = vsub.s32 %v421, %v423
    %v425 = vrot.slane %v404, %v424
    %v426 = vlaneseq
    %v427 = vshrl.u32 %v426, 7
    %v428 = vsub.s32 %v421, %v427
    %v429 = vrot.slane %v405, %v428
    %v430 = vlaneseq
    %v431 = vshrl.u32 %v430, 7
    %v432 = vsub.s32 %v421, %v431
    %v433 = vrot.slane %v406, %v432
    %v434 = vlaneseq
    %v435 = vshrl.u32 %v434, 7
    %v436 = vsub.s32 %v421, %v435
    %v437 = vrot.slane %v407, %v436
    %v438 = vlaneseq
    %v439 = vshrl.u32 %v438, 7
    %v440 = vsub.s32 %v421, %v439
    %v441 = vrot.slane %v408, %v440
    %v442 = vlaneseq
    %v443 = vshrl.u32 %v442, 7
    %v444 = vsub.s32 %v421, %v443
    %v445 = vrot.slane %v409, %v444
    %v446 = vlaneseq
    %v447 = vshrl.u32 %v446, 7
    %v448 = vsub.s32 %v421, %v447
    %v449 = vrot.slane %v410, %v448
    %v450 = vlaneseq
    %v451 = vshrl.u32 %v450, 7
    %v452 = vsub.s32 %v421, %v451
    %v453 = vrot.slane %v411, %v452
    %vm454 = vcmask 1041409
    %v455 = vsel %vm454, %v429, %v425
    %vm456 = vcmask 1042434
    %v457 = vsel %vm456, %v433, %v455
    %vm458 = vcmask 1043459
    %v459 = vsel %vm458, %v437, %v457
    %vm460 = vcmask 1044484
    %v461 = vsel %vm460, %v441, %v459
    %vm462 = vcmask 1045509
    %v463 = vsel %vm462, %v445, %v461
    %vm464 = vcmask 1046534
    %v465 = vsel %vm464, %v449, %v463
    %vm466 = vcmask 1047559
    %v467 = vsel %vm466, %v453, %v465
    %vm469 = vcmask 64512
    %v470 = vsel %vm469, %v467, -inf
    %471 = vmax.xlane.f32.xlu0 %v470
    %v472 = vpop.xlane.xlu0 %471
    %v474 = vlaneseq
    %v475 = vshrl.u32 %v474, 7
    %v476 = vsub.s32 0, %v475
    %v477 = vrot.slane %v472, %v476
    %v478 = vlaneseq
    %v479 = vshrl.u32 %v478, 7
    %v480 = vsub.s32 1, %v479
    %v481 = vrot.slane %v472, %v480
    %v482 = vlaneseq
    %v483 = vshrl.u32 %v482, 7
    %v484 = vsub.s32 2, %v483
    %v485 = vrot.slane %v472, %v484
    %v486 = vlaneseq
    %v487 = vshrl.u32 %v486, 7
    %v488 = vsub.s32 3, %v487
    %v489 = vrot.slane %v472, %v488
    %v490 = vlaneseq
    %v491 = vshrl.u32 %v490, 7
    %v492 = vsub.s32 4, %v491
    %v493 = vrot.slane %v472, %v492
    %v494 = vlaneseq
    %v495 = vshrl.u32 %v494, 7
    %v496 = vsub.s32 5, %v495
    %v497 = vrot.slane %v472, %v496
    %v498 = vlaneseq
    %v499 = vshrl.u32 %v498, 7
    %v500 = vsub.s32 6, %v499
    %v501 = vrot.slane %v472, %v500
    %v502 = vlaneseq
    %v503 = vshrl.u32 %v502, 7
    %v504 = vsub.s32 7, %v503
    %v505 = vrot.slane %v472, %v504
    %v514 = vsub.f32 %v404, %v477
    %v515 = vsub.f32 %v405, %v481
    %v516 = vsub.f32 %v406, %v485
    %v517 = vsub.f32 %v407, %v489
    %v518 = vsub.f32 %v408, %v493
    %v519 = vsub.f32 %v409, %v497
    %v520 = vsub.f32 %v410, %v501
    %v521 = vsub.f32 %v411, %v505
    %v522 = vmul.f32 %v514, 1.442695
    %v523 = vpow.pop %v522
    %v524 = vmul.f32 %v515, 1.442695
    %v525 = vpow.pop %v524
    %v526 = vmul.f32 %v516, 1.442695
    %v527 = vpow.pop %v526
    %v528 = vmul.f32 %v517, 1.442695
    %v529 = vpow.pop %v528
    %v530 = vmul.f32 %v518, 1.442695
    %v531 = vpow.pop %v530
    %v532 = vmul.f32 %v519, 1.442695
    %v533 = vpow.pop %v532
    %v534 = vmul.f32 %v520, 1.442695
    %v535 = vpow.pop %v534
    %v536 = vmul.f32 %v521, 1.442695
    %v537 = vpow.pop %v536
    %546 = vset.pattern.permute.xlu0 0
    %547 = vperm.xlu0 %546, %v523
    %v548 = vpop.permute.xlu0 %547
    %549 = vset.pattern.permute.xlu0 0
    %550 = vperm.xlu0 %549, %v525
    %v551 = vpop.permute.xlu0 %550
    %552 = vset.pattern.permute.xlu0 0
    %553 = vperm.xlu0 %552, %v527
    %v554 = vpop.permute.xlu0 %553
    %555 = vset.pattern.permute.xlu0 0
    %556 = vperm.xlu0 %555, %v529
    %v557 = vpop.permute.xlu0 %556
    %558 = vset.pattern.permute.xlu0 0
    %559 = vperm.xlu0 %558, %v531
    %v560 = vpop.permute.xlu0 %559
    %561 = vset.pattern.permute.xlu0 0
    %562 = vperm.xlu0 %561, %v533
    %v563 = vpop.permute.xlu0 %562
    %564 = vset.pattern.permute.xlu0 0
    %565 = vperm.xlu0 %564, %v535
    %v566 = vpop.permute.xlu0 %565
    %567 = vset.pattern.permute.xlu0 0
    %568 = vperm.xlu0 %567, %v537
    %v569 = vpop.permute.xlu0 %568
    %v570 = vlaneseq
    %v571 = vshrl.u32 %v570, 7
    %v572 = vsub.s32 %v421, %v571
    %v573 = vrot.slane %v548, %v572
    %v574 = vlaneseq
    %v575 = vshrl.u32 %v574, 7
    %v576 = vsub.s32 %v421, %v575
    %v577 = vrot.slane %v551, %v576
    %v578 = vlaneseq
    %v579 = vshrl.u32 %v578, 7
    %v580 = vsub.s32 %v421, %v579
    %v581 = vrot.slane %v554, %v580
    %v582 = vlaneseq
    %v583 = vshrl.u32 %v582, 7
    %v584 = vsub.s32 %v421, %v583
    %v585 = vrot.slane %v557, %v584
    %v586 = vlaneseq
    %v587 = vshrl.u32 %v586, 7
    %v588 = vsub.s32 %v421, %v587
    %v589 = vrot.slane %v560, %v588
    %v590 = vlaneseq
    %v591 = vshrl.u32 %v590, 7
    %v592 = vsub.s32 %v421, %v591
    %v593 = vrot.slane %v563, %v592
    %v594 = vlaneseq
    %v595 = vshrl.u32 %v594, 7
    %v596 = vsub.s32 %v421, %v595
    %v597 = vrot.slane %v566, %v596
    %v598 = vlaneseq
    %v599 = vshrl.u32 %v598, 7
    %v600 = vsub.s32 %v421, %v599
    %v601 = vrot.slane %v569, %v600
    %v602 = vsel %vm454, %v577, %v573
    %v603 = vsel %vm456, %v581, %v602
    %v604 = vsel %vm458, %v585, %v603
    %v605 = vsel %vm460, %v589, %v604
    %v606 = vsel %vm462, %v593, %v605
    %v607 = vsel %vm464, %v597, %v606
    %v608 = vsel %vm466, %v601, %v607
    %v610 = vsel %vm469, %v608, 0.0
    %611 = vadd.xlane.f32.xlu0 %v610
    %v612 = vpop.xlane.xlu0 %611
    %v613 = vrcp.pop %v612
    %v615 = vlaneseq
    %v616 = vshrl.u32 %v615, 7
    %v617 = vsub.s32 0, %v616
    %v618 = vrot.slane %v613, %v617
    %v619 = vlaneseq
    %v620 = vshrl.u32 %v619, 7
    %v621 = vsub.s32 1, %v620
    %v622 = vrot.slane %v613, %v621
    %v623 = vlaneseq
    %v624 = vshrl.u32 %v623, 7
    %v625 = vsub.s32 2, %v624
    %v626 = vrot.slane %v613, %v625
    %v627 = vlaneseq
    %v628 = vshrl.u32 %v627, 7
    %v629 = vsub.s32 3, %v628
    %v630 = vrot.slane %v613, %v629
    %v631 = vlaneseq
    %v632 = vshrl.u32 %v631, 7
    %v633 = vsub.s32 4, %v632
    %v634 = vrot.slane %v613, %v633
    %v635 = vlaneseq
    %v636 = vshrl.u32 %v635, 7
    %v637 = vsub.s32 5, %v636
    %v638 = vrot.slane %v613, %v637
    %v639 = vlaneseq
    %v640 = vshrl.u32 %v639, 7
    %v641 = vsub.s32 6, %v640
    %v642 = vrot.slane %v613, %v641
    %v643 = vlaneseq
    %v644 = vshrl.u32 %v643, 7
    %v645 = vsub.s32 7, %v644
    %v646 = vrot.slane %v613, %v645
    %v655 = vmul.f32 %v523, %v618
    %v656 = vmul.f32 %v525, %v622
    %v657 = vmul.f32 %v527, %v626
    %v658 = vmul.f32 %v529, %v630
    %v659 = vmul.f32 %v531, %v634
    %v660 = vmul.f32 %v533, %v638
    %v661 = vmul.f32 %v535, %v642
    %v662 = vmul.f32 %v537, %v646
    %664 = vset.pattern.permute.xlu0 0
    %665 = vperm.xlu0 %664, %v655
    %v666 = vpop.permute.xlu0 %665
    %669 = vset.pattern.permute.xlu0 0
    %670 = vperm.xlu0 %669, %v656
    %v671 = vpop.permute.xlu0 %670
    %674 = vset.pattern.permute.xlu0 0
    %675 = vperm.xlu0 %674, %v657
    %v676 = vpop.permute.xlu0 %675
    %679 = vset.pattern.permute.xlu0 0
    %680 = vperm.xlu0 %679, %v658
    %v681 = vpop.permute.xlu0 %680
    %684 = vset.pattern.permute.xlu0 0
    %685 = vperm.xlu0 %684, %v659
    %v686 = vpop.permute.xlu0 %685
    %689 = vset.pattern.permute.xlu0 0
    %690 = vperm.xlu0 %689, %v660
    %v691 = vpop.permute.xlu0 %690
    %694 = vset.pattern.permute.xlu0 0
    %695 = vperm.xlu0 %694, %v661
    %v696 = vpop.permute.xlu0 %695
    %699 = vset.pattern.permute.xlu0 0
    %700 = vperm.xlu0 %699, %v662
    %v701 = vpop.permute.xlu0 %700
    %v703 = vmul.f32 %v666, %v272
    %v704 = vmul.f32 %v671, %v273
    %v705 = vmul.f32 %v676, %v274
    %v706 = vmul.f32 %v681, %v275
    %v707 = vmul.f32 %v686, %v276
    %v708 = vmul.f32 %v691, %v277
    %v709 = vmul.f32 %v696, %v278
    %v710 = vmul.f32 %v701, %v279
    %v711 = vrot.slane %v703, 4
    %v712 = vadd.f32 %v703, %v711
    %v713 = vrot.slane %v712, 2
    %v714 = vadd.f32 %v712, %v713
    %v715 = vrot.slane %v714, 1
    %v716 = vadd.f32 %v714, %v715
    %v717 = vrot.slane %v704, 4
    %v718 = vadd.f32 %v704, %v717
    %v719 = vrot.slane %v718, 2
    %v720 = vadd.f32 %v718, %v719
    %v721 = vrot.slane %v720, 1
    %v722 = vadd.f32 %v720, %v721
    %v723 = vrot.slane %v705, 4
    %v724 = vadd.f32 %v705, %v723
    %v725 = vrot.slane %v724, 2
    %v726 = vadd.f32 %v724, %v725
    %v727 = vrot.slane %v726, 1
    %v728 = vadd.f32 %v726, %v727
    %v729 = vrot.slane %v706, 4
    %v730 = vadd.f32 %v706, %v729
    %v731 = vrot.slane %v730, 2
    %v732 = vadd.f32 %v730, %v731
    %v733 = vrot.slane %v732, 1
    %v734 = vadd.f32 %v732, %v733
    %v735 = vrot.slane %v707, 4
    %v736 = vadd.f32 %v707, %v735
    %v737 = vrot.slane %v736, 2
    %v738 = vadd.f32 %v736, %v737
    %v739 = vrot.slane %v738, 1
    %v740 = vadd.f32 %v738, %v739
    %v741 = vrot.slane %v708, 4
    %v742 = vadd.f32 %v708, %v741
    %v743 = vrot.slane %v742, 2
    %v744 = vadd.f32 %v742, %v743
    %v745 = vrot.slane %v744, 1
    %v746 = vadd.f32 %v744, %v745
    %v747 = vrot.slane %v709, 4
    %v748 = vadd.f32 %v709, %v747
    %v749 = vrot.slane %v748, 2
    %v750 = vadd.f32 %v748, %v749
    %v751 = vrot.slane %v750, 1
    %v752 = vadd.f32 %v750, %v751
    %v753 = vrot.slane %v710, 4
    %v754 = vadd.f32 %v710, %v753
    %v755 = vrot.slane %v754, 2
    %v756 = vadd.f32 %v754, %v755
    %v757 = vrot.slane %v756, 1
    %v758 = vadd.f32 %v756, %v757
    %v767 = vsel %vm454, %v722, %v716
    %v768 = vsel %vm456, %v728, %v767
    %v769 = vsel %vm458, %v734, %v768
    %v770 = vsel %vm460, %v740, %v769
    %v771 = vsel %vm462, %v746, %v770
    %v772 = vsel %vm464, %v752, %v771
    %v773 = vsel %vm466, %v758, %v772
    %775 = vst [vmem:[#allocation11] sm:$0xff] %v773
    // Predicated region
    $region50: #{tpu_custom_call.1} parent=1 // pred_check
      _
    $region51: #{tpu_custom_call.1} parent=1 // pred_check_branch
      %777 = sbr.rel (0) target = $region53
    $region52: #{tpu_custom_call.1} parent=1 // pred_region
      %s779 = ssub.s32 128, 128
      %780 = vsyncadd [#allocation5], %s779
      %s782 = sshll.u32 [#allocation11], 4
      %s783 = int_to_ptr.vmem [resolvable:$true] %s782
      %785 = dma.vmem_to_hbm [thread:$0]  %s783, 128, %s8, [#allocation5]
    $region53: #{tpu_custom_call.1} parent=1 // pred_fallthru
      _
    // Predicated region
    $region54: #{tpu_custom_call.1} parent=1 // pred_check
      _
    $region55: #{tpu_custom_call.1} parent=1 // pred_check_branch
      %787 = sbr.rel (0) target = $region57
    $region56: #{tpu_custom_call.1} parent=1 // pred_region
      %788 = dma.done [#allocation5], 128
    $region57: #{tpu_custom_call.1} parent=1 // pred_fallthru
      _
    %789 = vsyncpa [#allocation4], 1
    %790 = vsyncpa [#allocation7], 1
    %791 = vsyncpa [#allocation10], 1
    %792 = vsyncpa [#allocation5], 1

</llo_original>
